<compile_context>
chip_gen: v6e
topology: v6e:2x2x1
jax: 0.10.0
libtpu: 0.0.40
codegen_flags: <defaults>
</compile_context>

<pallas_src>
import jax
import jax.numpy as jnp
from jax.experimental import pallas as pl
from jax.experimental.pallas import tpu as pltpu

EPSILON = 1e-07
_LANES = 128
_DEFAULT_TILE_ROWS = 2048  # 2048 rows x 128 lanes = 256K samples per grid step


def _f1_loss_kernel(y_pred_ref, y_true_ref, out_ref, acc_ref):
    """One grid step over a batch tile.

    y_pred_ref : (C, tile_r, 128)  logits (C == 1 means "already predictions")
    y_true_ref : (tile_r, 128)     float32 labels
    out_ref    : (1, 1)            float32 SMEM scalar loss (written last step)
    acc_ref    : (3,)              float32 SMEM accumulator [tp, sum_yp, sum_yt]
    """
    pid = pl.program_id(0)

    @pl.when(pid == 0)
    def _init():
        acc_ref[0] = jnp.float32(0.0)
        acc_ref[1] = jnp.float32(0.0)
        acc_ref[2] = jnp.float32(0.0)

    yt = y_true_ref[...]                       # (tile_r, 128) f32
    n_cls = y_pred_ref.shape[0]

    if n_cls == 1:
        # Original module's y_pred.ndim == 1 path: values are the predictions.
        yp = y_pred_ref[0].astype(jnp.float32)
    elif n_cls == 2:
        # Binary argmax == elementwise compare of the two class slices (VPU only).
        yp = (y_pred_ref[1] > y_pred_ref[0]).astype(jnp.float32)
    else:
        # General argmax over the leading class axis (first occurrence wins,
        # matching torch.argmax); elementwise across C slices, no cross-lane work.
        x = y_pred_ref[...]
        ids = jax.lax.broadcasted_iota(jnp.int32, x.shape, 0)
        m = jnp.max(x, axis=0, keepdims=True)
        yp = jnp.min(
            jnp.where(x == m, ids, jnp.int32(n_cls)), axis=0
        ).astype(jnp.float32)

    # Three plain partial sums; fp / fn are derived in the epilogue.
    acc_ref[0] += jnp.sum(yt * yp)
    acc_ref[1] += jnp.sum(yp)
    acc_ref[2] += jnp.sum(yt)

    @pl.when(pid == pl.num_programs(0) - 1)
    def _finalize():
        eps = jnp.float32(EPSILON)
        tp = acc_ref[0]
        fp = acc_ref[1] - tp          # sum((1 - yt) * yp)
        fn = acc_ref[2] - tp          # sum(yt * (1 - yp))
        precision = tp / (tp + fp + eps)
        recall = tp / (tp + fn + eps)
        f1 = 2.0 * (precision * recall) / (precision + recall + eps)
        f1 = jnp.clip(f1, eps, 1.0 - eps)
        out_ref[0, 0] = 1.0 - f1


def f1_loss(y_pred, y_true, *, tile_rows=_DEFAULT_TILE_ROWS):
    """y_pred: (N, C) logits or (N,) predictions; y_true: (N,). Returns scalar loss."""
    assert y_pred.ndim in (1, 2)
    assert y_true.ndim == 1
    n = y_true.shape[0]
    assert y_pred.shape[0] == n
    n_cls = y_pred.shape[1] if y_pred.ndim == 2 else 1

    rows = pl.cdiv(n, _LANES)
    if rows <= tile_rows:
        tile_r = rows                     # single tile: full-extent block is OK
        rows_pad = rows
    else:
        tile_r = max(8, (tile_rows // 8) * 8)   # keep sublane dim 8-aligned
        rows_pad = pl.cdiv(rows, tile_r) * tile_r
    n_pad = rows_pad * _LANES
    pad = n_pad - n

    # Zero padding is neutral: an all-zero logit row argmaxes to class 0
    # (yp == 0) and padded labels are 0, so padded samples add nothing.
    if y_pred.ndim == 2:
        xp = jnp.pad(y_pred, ((0, pad), (0, 0))) if pad else y_pred
        # Lane-dense: classes on the leading axis, batch packed onto (rows, 128).
        xp = jnp.transpose(xp).reshape(n_cls, rows_pad, _LANES)
    else:
        xp = jnp.pad(y_pred, ((0, pad),)) if pad else y_pred
        xp = xp.astype(jnp.float32).reshape(1, rows_pad, _LANES)

    yt = y_true.astype(jnp.float32)
    if pad:
        yt = jnp.pad(yt, ((0, pad),))
    yt = yt.reshape(rows_pad, _LANES)

    grid = (rows_pad // tile_r,)

    out = pl.pallas_call(
        _f1_loss_kernel,
        out_shape=jax.ShapeDtypeStruct((1, 1), jnp.float32),
        grid_spec=pltpu.PrefetchScalarGridSpec(
            num_scalar_prefetch=0,
            grid=grid,
            in_specs=[
                pl.BlockSpec((n_cls, tile_r, _LANES), lambda i: (0, i, 0)),
                pl.BlockSpec((tile_r, _LANES), lambda i: (i, 0)),
            ],
            out_specs=pl.BlockSpec(memory_space=pltpu.SMEM),
            scratch_shapes=[pltpu.SMEM((3,), jnp.float32)],
        ),
        compiler_params=pltpu.CompilerParams(
            dimension_semantics=("arbitrary",),
        ),
    )(xp, yt)
    return out[0, 0]


def _reference(y_pred, y_true):
    eps = EPSILON
    if y_pred.ndim == 2:
        yp = jnp.argmax(y_pred, axis=1).astype(jnp.float32)
    else:
        yp = y_pred.astype(jnp.float32)
    yt = y_true.astype(jnp.float32)
    tp = jnp.sum(yt * yp)
    fp = jnp.sum((1.0 - yt) * yp)
    fn = jnp.sum(yt * (1.0 - yp))
    precision = tp / (tp + fp + eps)
    recall = tp / (tp + fn + eps)
    f1 = 2.0 * (precision * recall) / (precision + recall + eps)
    f1 = jnp.clip(f1, eps, 1.0 - eps)
    return 1.0 - f1


if __name__ == "__main__":
    key = jax.random.PRNGKey(0)
    k1, k2, k3, k4 = jax.random.split(key, 4)

    # Small binary-classification case (the only case where the F1 math is
    # meaningful, matching the PyTorch module).
    N, C = 8, 2
    y_pred = jax.random.normal(k1, (N, C), dtype=jnp.float32)
    y_true = jax.random.bernoulli(k2, 0.5, (N,)).astype(jnp.int32)

    loss = jax.block_until_ready(f1_loss(y_pred, y_true))
    ref = _reference(y_pred, y_true)
    assert jnp.allclose(loss, ref, atol=1e-5, rtol=1e-5), (loss, ref)

    # Multi-step grid / accumulator path (small tile on purpose).
    N2 = 8 * _LANES * 3
    y_pred2 = jax.random.normal(k3, (N2, C), dtype=jnp.float32)
    y_true2 = jax.random.bernoulli(k4, 0.5, (N2,)).astype(jnp.int32)
    loss2 = jax.block_until_ready(f1_loss(y_pred2, y_true2, tile_rows=8))
    ref2 = _reference(y_pred2, y_true2)
    assert jnp.allclose(loss2, ref2, atol=1e-5, rtol=1e-5), (loss2, ref2)

    # 1-D prediction path (y_pred already holds predicted labels).
    y_pred_1d = jnp.argmax(y_pred, axis=1).astype(jnp.float32)
    loss1d = jax.block_until_ready(f1_loss(y_pred_1d, y_true))
    assert jnp.allclose(loss1d, ref, atol=1e-5, rtol=1e-5), (loss1d, ref)

    print("KERNEL_OK")
</pallas_src>

<mosaic_0001>
module attributes {stable_mosaic.version = 11 : i64} {
  func.func @_f1_loss_kernel(%arg0: i32, %arg1: memref<2x1x128xf32, #tpu.memory_space<vmem>>, %arg2: memref<1x128xf32, #tpu.memory_space<vmem>>, %arg3: memref<1x1xf32, #tpu.memory_space<smem>>, %arg4: memref<3xf32, #tpu.memory_space<smem>>) attributes {dimension_semantics = [#tpu.dimension_semantics<arbitrary>], iteration_bounds = array<i64: 1>, scalar_prefetch = 0 : i64, scratch_operands = 1 : i64, tpu.core_type = #tpu.core_type<tc>, window_params = [{transform_indices = @transform_0, window_bounds = array<i64: 2, 1, 128>}, {transform_indices = @transform_1, window_bounds = array<i64: 1, 128>}, {transform_indices = @transform_2, window_bounds = array<i64: 1, 1>}]} {
    %c0_i32 = arith.constant 0 : i32
    %0 = arith.cmpi eq, %arg0, %c0_i32 : i32
    %1 = arith.extui %0 : i1 to i32
    %c0_i32_0 = arith.constant 0 : i32
    %2 = arith.cmpi ne, %1, %c0_i32_0 : i32
    scf.if %2 {
      %cst_16 = arith.constant 0.000000e+00 : f32
      %c0_17 = arith.constant 0 : index
      %36 = memref.load %arg4[%c0_17] : memref<3xf32, #tpu.memory_space<smem>>
      memref.store %cst_16, %arg4[%c0_17] : memref<3xf32, #tpu.memory_space<smem>>
      %cst_18 = arith.constant 0.000000e+00 : f32
      %c1_19 = arith.constant 1 : index
      %37 = memref.load %arg4[%c1_19] : memref<3xf32, #tpu.memory_space<smem>>
      memref.store %cst_18, %arg4[%c1_19] : memref<3xf32, #tpu.memory_space<smem>>
      %cst_20 = arith.constant 0.000000e+00 : f32
      %c2_21 = arith.constant 2 : index
      %38 = memref.load %arg4[%c2_21] : memref<3xf32, #tpu.memory_space<smem>>
      memref.store %cst_20, %arg4[%c2_21] : memref<3xf32, #tpu.memory_space<smem>>
    } else {
    }
    %c0 = arith.constant 0 : index
    %c0_1 = arith.constant 0 : index
    %3 = vector.load %arg2[%c0, %c0_1] : memref<1x128xf32, #tpu.memory_space<vmem>>, vector<1x128xf32>
    %c1 = arith.constant 1 : index
    %c0_2 = arith.constant 0 : index
    %c0_3 = arith.constant 0 : index
    %4 = vector.load %arg1[%c1, %c0_2, %c0_3] : memref<2x1x128xf32, #tpu.memory_space<vmem>>, vector<1x1x128xf32>
    %5 = vector.shape_cast %4 : vector<1x1x128xf32> to vector<1x128xf32>
    %c0_4 = arith.constant 0 : index
    %c0_5 = arith.constant 0 : index
    %c0_6 = arith.constant 0 : index
    %6 = vector.load %arg1[%c0_4, %c0_5, %c0_6] : memref<2x1x128xf32, #tpu.memory_space<vmem>>, vector<1x1x128xf32>
    %7 = vector.shape_cast %6 : vector<1x1x128xf32> to vector<1x128xf32>
    %8 = arith.cmpf ogt, %5, %7 : vector<1x128xf32>
    %9 = arith.extui %8 : vector<1x128xi1> to vector<1x128xi32>
    %10 = arith.sitofp %9 : vector<1x128xi32> to vector<1x128xf32>
    %c0_7 = arith.constant 0 : index
    %11 = memref.load %arg4[%c0_7] : memref<3xf32, #tpu.memory_space<smem>>
    %12 = arith.mulf %3, %10 : vector<1x128xf32>
    %13 = vector.shape_cast %12 : vector<1x128xf32> to vector<1x1x128xf32>
    %cst = arith.constant dense<0.000000e+00> : vector<1xf32>
    %14 = vector.multi_reduction <add>, %13, %cst [1, 2] : vector<1x1x128xf32> to vector<1xf32>
    %15 = vector.shape_cast %14 : vector<1xf32> to vector<1x1x1xf32>
    %16 = vector.extract %15[0, 0, 0] : f32 from vector<1x1x1xf32>
    %17 = arith.addf %11, %16 : f32
    %c0_8 = arith.constant 0 : index
    %18 = memref.load %arg4[%c0_8] : memref<3xf32, #tpu.memory_space<smem>>
    memref.store %17, %arg4[%c0_8] : memref<3xf32, #tpu.memory_space<smem>>
    %c1_9 = arith.constant 1 : index
    %19 = memref.load %arg4[%c1_9] : memref<3xf32, #tpu.memory_space<smem>>
    %20 = vector.shape_cast %10 : vector<1x128xf32> to vector<1x1x128xf32>
    %cst_10 = arith.constant dense<0.000000e+00> : vector<1xf32>
    %21 = vector.multi_reduction <add>, %20, %cst_10 [1, 2] : vector<1x1x128xf32> to vector<1xf32>
    %22 = vector.shape_cast %21 : vector<1xf32> to vector<1x1x1xf32>
    %23 = vector.extract %22[0, 0, 0] : f32 from vector<1x1x1xf32>
    %24 = arith.addf %19, %23 : f32
    %c1_11 = arith.constant 1 : index
    %25 = memref.load %arg4[%c1_11] : memref<3xf32, #tpu.memory_space<smem>>
    memref.store %24, %arg4[%c1_11] : memref<3xf32, #tpu.memory_space<smem>>
    %c2 = arith.constant 2 : index
    %26 = memref.load %arg4[%c2] : memref<3xf32, #tpu.memory_space<smem>>
    %27 = vector.shape_cast %3 : vector<1x128xf32> to vector<1x1x128xf32>
    %cst_12 = arith.constant dense<0.000000e+00> : vector<1xf32>
    %28 = vector.multi_reduction <add>, %27, %cst_12 [1, 2] : vector<1x1x128xf32> to vector<1xf32>
    %29 = vector.shape_cast %28 : vector<1xf32> to vector<1x1x1xf32>
    %30 = vector.extract %29[0, 0, 0] : f32 from vector<1x1x1xf32>
    %31 = arith.addf %26, %30 : f32
    %c2_13 = arith.constant 2 : index
    %32 = memref.load %arg4[%c2_13] : memref<3xf32, #tpu.memory_space<smem>>
    memref.store %31, %arg4[%c2_13] : memref<3xf32, #tpu.memory_space<smem>>
    %c0_i32_14 = arith.constant 0 : i32
    %33 = arith.cmpi eq, %arg0, %c0_i32_14 : i32
    %34 = arith.extui %33 : i1 to i32
    %c0_i32_15 = arith.constant 0 : i32
    %35 = arith.cmpi ne, %34, %c0_i32_15 : i32
    scf.if %35 {
      %c0_16 = arith.constant 0 : index
      %36 = memref.load %arg4[%c0_16] : memref<3xf32, #tpu.memory_space<smem>>
      %c1_17 = arith.constant 1 : index
      %37 = memref.load %arg4[%c1_17] : memref<3xf32, #tpu.memory_space<smem>>
      %38 = arith.subf %37, %36 : f32
      %c2_18 = arith.constant 2 : index
      %39 = memref.load %arg4[%c2_18] : memref<3xf32, #tpu.memory_space<smem>>
      %40 = arith.subf %39, %36 : f32
      %41 = arith.addf %36, %38 : f32
      %cst_19 = arith.constant 1.000000e-07 : f32
      %42 = arith.addf %41, %cst_19 : f32
      %43 = arith.divf %36, %42 : f32
      %44 = arith.addf %36, %40 : f32
      %cst_20 = arith.constant 1.000000e-07 : f32
      %45 = arith.addf %44, %cst_20 : f32
      %46 = arith.divf %36, %45 : f32
      %47 = arith.mulf %43, %46 : f32
      %cst_21 = arith.constant 2.000000e+00 : f32
      %48 = arith.mulf %cst_21, %47 : f32
      %49 = arith.addf %43, %46 : f32
      %cst_22 = arith.constant 1.000000e-07 : f32
      %50 = arith.addf %49, %cst_22 : f32
      %51 = arith.divf %48, %50 : f32
      %cst_23 = arith.constant 1.000000e+00 : f32
      %cst_24 = arith.constant 1.000000e-07 : f32
      %52 = arith.subf %cst_23, %cst_24 : f32
      %cst_25 = arith.constant 1.000000e-07 : f32
      %53 = arith.maximumf %cst_25, %51 : f32
      %54 = arith.minimumf %52, %53 : f32
      %cst_26 = arith.constant 1.000000e+00 : f32
      %55 = arith.subf %cst_26, %54 : f32
      %c0_27 = arith.constant 0 : index
      %c0_28 = arith.constant 0 : index
      %56 = memref.load %arg3[%c0_27, %c0_28] : memref<1x1xf32, #tpu.memory_space<smem>>
      memref.store %55, %arg3[%c0_27, %c0_28] : memref<1x1xf32, #tpu.memory_space<smem>>
    } else {
    }
    return
  }
  func.func @transform_0(%arg0: i32) -> (i32, i32, i32) {
    %c0_i32 = arith.constant 0 : i32
    %c0_i32_0 = arith.constant 0 : i32
    %c0_i32_1 = arith.constant 0 : i32
    return %c0_i32, %arg0, %c0_i32_0 : i32, i32, i32
  }
  func.func @transform_1(%arg0: i32) -> (i32, i32) {
    %c0_i32 = arith.constant 0 : i32
    %c0_i32_0 = arith.constant 0 : i32
    return %arg0, %c0_i32 : i32, i32
  }
  func.func @transform_2(%arg0: i32) -> (i32, i32) {
    %c0_i32 = arith.constant 0 : i32
    %c0_i32_0 = arith.constant 0 : i32
    %c0_i32_1 = arith.constant 0 : i32
    return %c0_i32, %c0_i32_0 : i32, i32
  }
}

</mosaic_0001>

<llo_original>
// kernel: tpu_custom_call.1
$region0: #{tpu_custom_call.1}
  #allocation0 [shape = 'u32[]', space=smem, size = 0x4, offset = 0x4, fixed_abs, tag = 'smem constant byte address 0x4 - core index']
  #allocation1 [shape = 'u32[144,128]{1,0:T(1,128)}', space=vmem, size = 0x12000, scoped, tag = 'internal scratch']
  #allocation2 [shape = 'f32[3]{0:T(128)}', space=smem, size = 0x200, scoped, tag = 'scratch operand']
  %s0 = inlined_call_operand.hbm [shape: f32[2,1,128], index: 0, kind: input, shape index: {}]
  %s1 = inlined_call_operand.vmem [shape: f32[1,128], index: 1, kind: input, shape index: {}]
  %s2 = inlined_call_operand.hbm [shape: f32[1,1], index: 2, kind: output, shape index: {}]
  %s3 = sld [smem:[#allocation0]]
  $region30: #{tpu_custom_call.1} parent=0
    _
  %s5 = ssub.s32 1, %s3
  %s6 = scalar_select 0, %s5, %s3
  $region1: #{tpu_custom_call.1} parent=0
    #allocation3 [shape = 'u8[1024]{0}', space=vmem, size = 0x400, scoped, tag = 'input window, operand 0, single buffered']
    #allocation4 [shape = 's32[1]{0}', space=sflag, size = 0x4, scoped, tag = 'scoped memory for tpu_custom_call.1']
    #allocation5 [shape = 's32[1]{0}', space=sflag, size = 0x4, scoped, tag = 'scoped memory for tpu_custom_call.1']
    #allocation6 [shape = 'u8[512]{0}', space=smem, size = 0x200, scoped, tag = 'output window, operand 0, single buffered']
    %7 = vsyncpa [#allocation4], 0
    %8 = vsyncpa [#allocation5], 0
    // Predicated region
    $region2: #{tpu_custom_call.1} parent=1 // pred_check
      _
    $region3: #{tpu_custom_call.1} parent=1 // pred_check_branch
      %10 = sbr.rel (0) target = $region5
    $region4: #{tpu_custom_call.1} parent=1 // pred_region
      %s12 = ssub.s32 32, 32
      %13 = vsyncadd [#allocation4], %s12
      %s14 = sshll.u32 [#allocation3], 4
      %s15 = int_to_ptr.vmem [resolvable:$true] %s14
      %20 = dma.hbm_to_vmem [thread:$0]  %s0, 32, %s15, [#allocation4], 16, 16, 1
    $region5: #{tpu_custom_call.1} parent=1 // pred_fallthru
      _
    // Predicated region
    $region6: #{tpu_custom_call.1} parent=1 // pred_check
      _
    $region7: #{tpu_custom_call.1} parent=1 // pred_check_branch
      %22 = sbr.rel (0) target = $region9
    $region8: #{tpu_custom_call.1} parent=1 // pred_region
      _
    $region9: #{tpu_custom_call.1} parent=1 // pred_fallthru
      _
    // Predicated region
    $region10: #{tpu_custom_call.1} parent=1 // pred_check
      _
    $region11: #{tpu_custom_call.1} parent=1 // pred_check_branch
      %24 = sbr.rel (0) target = $region13
    $region12: #{tpu_custom_call.1} parent=1 // pred_region
      %25 = dma.done [#allocation4], 32
    $region13: #{tpu_custom_call.1} parent=1 // pred_fallthru
      _
    %p26 = scmp.eq.s32.totalorder 0, 0
    // Predicated region
    $region14: #{tpu_custom_call.1} parent=1 // pred_check
      %p27 = pneg %p26
    $region15: #{tpu_custom_call.1} parent=1 // pred_check_branch
      %29 = sbr.rel (%p27) target = $region17
    $region16: #{tpu_custom_call.1} parent=1 // pred_region
      %s30 = scalar_lea.smem [#allocation2], 0
      %31 = sst [smem:[%s30]] 0.0
      %s32 = scalar_lea.smem [#allocation2], 1
      %33 = sst [smem:[%s32]] 0.0
      %s34 = scalar_lea.smem [#allocation2], 2
      %35 = sst [smem:[%s34]] 0.0
    $region17: #{tpu_custom_call.1} parent=1 // pred_fallthru
      _
    %v36 = vld [vmem:[%s1] sm:$0x1]
    %s37 = scalar_lea.vmem [#allocation3], 1
    %v38 = vld [vmem:[%s37] sm:$0x1]
    %v39 = vld [vmem:[#allocation3] sm:$0x1]
    %vm40 = vcmp.gt.f32.partialorder %v38, %v39
    %v41 = vsel %vm40, 1, 0
    %v42 = vcvt.s32.f32 %v41
    %s43 = sld [smem:[#allocation2]]
    %v44 = vmul.f32 %v36, %v42
    %vm45 = vcmask 1040384
    %v46 = vsel %vm45, %v44, 0.0
    %47 = vadd.xlane.f32.xlu0 %v46
    %v48 = vpop.xlane.xlu0 %47
    %v49 = vrot.slane %v48, 4
    %v50 = vadd.f32 %v48, %v49
    %v51 = vrot.slane %v50, 2
    %v52 = vadd.f32 %v50, %v51
    %v53 = vrot.slane %v52, 1
    %v54 = vadd.f32 %v52, %v53
    %s55 = vtos %v54
    %s56 = sadd.f32 %s43, %s55
    %s57 = scalar_lea.smem [#allocation2], 0
    %58 = sst [smem:[%s57]] %s56
    %s59 = sld [smem:[#allocation2 + $0x1]]
    %v60 = vsel %vm45, %v42, 0.0
    %61 = vadd.xlane.f32.xlu0 %v60
    %v62 = vpop.xlane.xlu0 %61
    %v63 = vrot.slane %v62, 4
    %v64 = vadd.f32 %v62, %v63
    %v65 = vrot.slane %v64, 2
    %v66 = vadd.f32 %v64, %v65
    %v67 = vrot.slane %v66, 1
    %v68 = vadd.f32 %v66, %v67
    %s69 = vtos %v68
    %s70 = sadd.f32 %s59, %s69
    %s71 = scalar_lea.smem [#allocation2], 1
    %72 = sst [smem:[%s71]] %s70
    %s73 = sld [smem:[#allocation2 + $0x2]]
    %v74 = vsel %vm45, %v36, 0.0
    %75 = vadd.xlane.f32.xlu0 %v74
    %v76 = vpop.xlane.xlu0 %75
    %v77 = vrot.slane %v76, 4
    %v78 = vadd.f32 %v76, %v77
    %v79 = vrot.slane %v78, 2
    %v80 = vadd.f32 %v78, %v79
    %v81 = vrot.slane %v80, 1
    %v82 = vadd.f32 %v80, %v81
    %s83 = vtos %v82
    %s84 = sadd.f32 %s73, %s83
    %s85 = scalar_lea.smem [#allocation2], 2
    %86 = sst [smem:[%s85]] %s84
    // Predicated region
    $region18: #{tpu_custom_call.1} parent=1 // pred_check
      %p87 = pneg %p26
    $region19: #{tpu_custom_call.1} parent=1 // pred_check_branch
      %89 = sbr.rel (%p87) target = $region21
    $region20: #{tpu_custom_call.1} parent=1 // pred_region
      %s90 = sld [smem:[#allocation2]]
      %s91 = sld [smem:[#allocation2 + $0x1]]
      %s92 = ssub.f32 %s91, %s90
      %s93 = sld [smem:[#allocation2 + $0x2]]
      %s94 = ssub.f32 %s93, %s90
      %s95 = sadd.f32 %s90, %s92
      %s96 = sadd.f32 %s95, 1e-07
      %v97 = vstv %s96
      %v98 = vrcp.pop %v97
      %s99 = vtos %v98
      %s100 = smul.f32 %s90, %s99
      %s101 = sadd.f32 %s90, %s94
      %s102 = sadd.f32 %s101, 1e-07
      %v103 = vstv %s102
      %v104 = vrcp.pop %v103
      %s105 = vtos %v104
      %s106 = smul.f32 %s90, %s105
      %s107 = smul.f32 %s100, %s106
      %s108 = smul.f32 %s107, 2.0
      %s109 = sadd.f32 %s100, %s106
      %s110 = sadd.f32 %s109, 1e-07
      %v111 = vstv %s110
      %v112 = vrcp.pop %v111
      %s113 = vtos %v112
      %s114 = smul.f32 %s108, %s113
      %s115 = smax.f32 %s114, 1e-07
      %s116 = smin.f32 %s115, 0.9999999
      %s117 = ssub.f32 1.0, %s116
      %s118 = scalar_lea.smem [#allocation6], 0
      %119 = sst [smem:[%s118]] %s117
    $region21: #{tpu_custom_call.1} parent=1 // pred_fallthru
      _
    // Predicated region
    $region22: #{tpu_custom_call.1} parent=1 // pred_check
      _
    $region23: #{tpu_custom_call.1} parent=1 // pred_check_branch
      %121 = sbr.rel (0) target = $region25
    $region24: #{tpu_custom_call.1} parent=1 // pred_region
      %s123 = ssub.s32 16, 16
      %124 = vsyncadd [#allocation5], %s123
      %127 = dma.smem_to_hbm [#allocation6], 16, %s2, [#allocation5]
    $region25: #{tpu_custom_call.1} parent=1 // pred_fallthru
      _
    // Predicated region
    $region26: #{tpu_custom_call.1} parent=1 // pred_check
      _
    $region27: #{tpu_custom_call.1} parent=1 // pred_check_branch
      %129 = sbr.rel (0) target = $region29
    $region28: #{tpu_custom_call.1} parent=1 // pred_region
      %130 = dma.done [#allocation5], 16
    $region29: #{tpu_custom_call.1} parent=1 // pred_fallthru
      _
    %131 = sfence
    %132 = vsyncpa [#allocation4], 1
    %133 = vsyncpa [#allocation5], 1

</llo_original>
